<compile_context>
chip_gen: v7x
topology: tpu7x:2x2x1
jax: 0.10.0
libtpu: 0.0.40
codegen_flags: <defaults>
</compile_context>

<pallas_src>
import jax
import jax.numpy as jnp
from jax.experimental import pallas as pl
from jax.experimental.pallas import tpu as pltpu


# ---------------------------------------------------------------------------
# Kernel
# ---------------------------------------------------------------------------
def _log1p_accurate(x):
    # Accurate log1p using only ops with guaranteed Mosaic lowerings
    # (log/add/sub/div/cmp/select).  Standard compensation trick:
    #   u = 1 + x ;  log1p(x) = x                    if u == 1 (x tiny)
    #              = log(u) * x / (u - 1)            otherwise
    # Edge cases: x=-1 -> -inf, x<-1 -> NaN, NaN -> NaN (all match torch.atanh needs).
    u = 1.0 + x
    return jnp.where(u == 1.0, x, jnp.log(u) * (x / (u - 1.0)))


def _invtanh_kernel(x_ref, o_ref):
    # Load in storage dtype, compute in f32 vregs, store back in storage dtype.
    x = x_ref[...].astype(jnp.float32)
    y = 0.5 * (_log1p_accurate(x) - _log1p_accurate(-x))
    o_ref[...] = y.astype(o_ref.dtype)


# ---------------------------------------------------------------------------
# Wrapper
# ---------------------------------------------------------------------------
_TARGET_BLOCK_BYTES = 4 * 1024 * 1024   # ~4 MiB per block buffer (in and out each)
_VMEM_LIMIT_BYTES = 32 * 1024 * 1024    # covers 2x(in)+2x(out) double buffers on v5e/v6e/v7x
_SPLIT_THRESHOLD_BYTES = 1 * 1024 * 1024  # split single-block inputs above this (v7x 2 TCs)


def _sublane_multiple(dtype) -> int:
    # Sublane packing: 8 rows per vreg for 32-bit dtypes, 16 for 16-bit, 32 for 8-bit.
    bits = jnp.dtype(dtype).itemsize * 8
    return max(8, 256 // bits)


def invtanh(x):
    """Element-wise atanh(x) (torch.atanh semantics) as one Pallas TPU call."""
    orig_shape, dtype = x.shape, x.dtype
    n = x.size
    if n == 0:
        return x

    itemsize = jnp.dtype(dtype).itemsize
    sub = _sublane_multiple(dtype)

    # Lane-dense layout.  Reshape of a contiguous array is a free bitcast, so the
    # common (n % 128 == 0) path adds zero extra HBM traffic.
    if n % 128 == 0:
        lanes = 512 if n % 512 == 0 else 128
        padded_n = n
    else:
        # Rare odd-size fallback: minimal pad to the next multiple of 128.
        # TODO(synk): could switch to a 1-D ragged block to drop this extra pass.
        lanes = 128
        padded_n = pl.cdiv(n, 128) * 128

    flat = x.reshape(-1)
    if padded_n != n:
        flat = jnp.pad(flat, (0, padded_n - n))   # pad value 0: atanh(0) == 0
    rows = padded_n // lanes

    # Block sizing: ~4 MiB per buffer, sublane-aligned rows; ensure >=2 grid steps
    # for non-trivial single-block inputs so both v7x TensorCores get work.
    block_rows = _TARGET_BLOCK_BYTES // (lanes * itemsize)
    block_rows = max(sub, (block_rows // sub) * sub)
    if block_rows >= rows:
        total_bytes = rows * lanes * itemsize
        if rows >= 2 * sub and total_bytes > _SPLIT_THRESHOLD_BYTES:
            half = pl.cdiv(rows, 2)
            block_rows = min(rows, ((half + sub - 1) // sub) * sub)
        else:
            block_rows = rows   # full extent; allowed even if not a multiple of 8

    x2d = flat.reshape(rows, lanes)
    grid = pl.cdiv(rows, block_rows)   # ragged last block is masked by Pallas

    out2d = pl.pallas_call(
        _invtanh_kernel,
        out_shape=jax.ShapeDtypeStruct((rows, lanes), dtype),
        grid=(grid,),
        in_specs=[pl.BlockSpec((block_rows, lanes), lambda i: (i, 0))],
        out_specs=pl.BlockSpec((block_rows, lanes), lambda i: (i, 0)),
        compiler_params=pltpu.CompilerParams(
            dimension_semantics=("parallel",),
            vmem_limit_bytes=_VMEM_LIMIT_BYTES,
        ),
    )(x2d)

    out = out2d.reshape(-1)
    if padded_n != n:
        out = out[:n]
    return out.reshape(orig_shape)


# ---------------------------------------------------------------------------
if __name__ == "__main__":
    key = jax.random.PRNGKey(0)
    # Small deterministic input for an element-wise activation; values strictly
    # inside (-1, 1) so the reference comparison is finite.
    x = 0.95 * jnp.tanh(jax.random.normal(key, (2, 4, 16, 16), jnp.float32))

    y = invtanh(x)
    jax.block_until_ready(y)

    ref = jnp.arctanh(x)
    assert y.shape == x.shape and y.dtype == x.dtype
    assert jnp.allclose(y, ref, rtol=1e-5, atol=1e-5), float(jnp.max(jnp.abs(y - ref)))
    print("KERNEL_OK")
</pallas_src>

<mosaic_0001>
module attributes {stable_mosaic.version = 11 : i64} {
  func.func @_invtanh_kernel(%arg0: i32, %arg1: memref<4x512xf32, #tpu.memory_space<vmem>>, %arg2: memref<4x512xf32, #tpu.memory_space<vmem>>) attributes {dimension_semantics = [#tpu.dimension_semantics<parallel>], iteration_bounds = array<i64: 1>, scalar_prefetch = 0 : i64, scratch_operands = 0 : i64, tpu.core_type = #tpu.core_type<tc>, window_params = [{transform_indices = @transform_0, window_bounds = array<i64: 4, 512>}, {transform_indices = @transform_1, window_bounds = array<i64: 4, 512>}]} {
    %c0 = arith.constant 0 : index
    %c0_0 = arith.constant 0 : index
    %0 = vector.load %arg1[%c0, %c0_0] : memref<4x512xf32, #tpu.memory_space<vmem>>, vector<4x512xf32>
    %cst = arith.constant 1.000000e+00 : f32
    %1 = vector.broadcast %cst : f32 to vector<4x512xf32>
    %2 = arith.addf %1, %0 : vector<4x512xf32>
    %cst_1 = arith.constant 1.000000e+00 : f32
    %3 = vector.broadcast %cst_1 : f32 to vector<4x512xf32>
    %4 = arith.cmpf oeq, %2, %3 : vector<4x512xf32>
    %5 = math.log %2 : vector<4x512xf32>
    %cst_2 = arith.constant 1.000000e+00 : f32
    %6 = vector.broadcast %cst_2 : f32 to vector<4x512xf32>
    %7 = arith.subf %2, %6 : vector<4x512xf32>
    %8 = arith.divf %0, %7 : vector<4x512xf32>
    %9 = arith.mulf %5, %8 : vector<4x512xf32>
    %10 = arith.select %4, %0, %9 : vector<4x512xi1>, vector<4x512xf32>
    %cst_3 = arith.constant 0.000000e+00 : f32
    %11 = vector.broadcast %cst_3 : f32 to vector<4x512xf32>
    %12 = arith.subf %11, %0 : vector<4x512xf32>
    %cst_4 = arith.constant 1.000000e+00 : f32
    %13 = vector.broadcast %cst_4 : f32 to vector<4x512xf32>
    %14 = arith.addf %13, %12 : vector<4x512xf32>
    %cst_5 = arith.constant 1.000000e+00 : f32
    %15 = vector.broadcast %cst_5 : f32 to vector<4x512xf32>
    %16 = arith.cmpf oeq, %14, %15 : vector<4x512xf32>
    %17 = math.log %14 : vector<4x512xf32>
    %cst_6 = arith.constant 1.000000e+00 : f32
    %18 = vector.broadcast %cst_6 : f32 to vector<4x512xf32>
    %19 = arith.subf %14, %18 : vector<4x512xf32>
    %20 = arith.divf %12, %19 : vector<4x512xf32>
    %21 = arith.mulf %17, %20 : vector<4x512xf32>
    %22 = arith.select %16, %12, %21 : vector<4x512xi1>, vector<4x512xf32>
    %23 = arith.subf %10, %22 : vector<4x512xf32>
    %cst_7 = arith.constant 5.000000e-01 : f32
    %24 = vector.broadcast %cst_7 : f32 to vector<4x512xf32>
    %25 = arith.mulf %24, %23 : vector<4x512xf32>
    %c0_8 = arith.constant 0 : index
    %c0_9 = arith.constant 0 : index
    %26 = vector.load %arg2[%c0_8, %c0_9] : memref<4x512xf32, #tpu.memory_space<vmem>>, vector<4x512xf32>
    tpu.vector_store %arg2[%c0_8, %c0_9], %25 {strides = array<i32>} : memref<4x512xf32, #tpu.memory_space<vmem>>, vector<4x512xf32>,
    return
  }
  func.func @transform_0(%arg0: i32) -> (i32, i32) {
    %c0_i32 = arith.constant 0 : i32
    %c0_i32_0 = arith.constant 0 : i32
    return %arg0, %c0_i32 : i32, i32
  }
  func.func @transform_1(%arg0: i32) -> (i32, i32) {
    %c0_i32 = arith.constant 0 : i32
    %c0_i32_0 = arith.constant 0 : i32
    return %arg0, %c0_i32 : i32, i32
  }
}

</mosaic_0001>

<llo_original>
// kernel: tpu_custom_call.1
$region0: #{tpu_custom_call.1}
  #allocation0 [shape = 'u32[]', space=smem, size = 0x4, offset = 0x4, fixed_abs, tag = 'smem constant byte address 0x4 - core index']
  #allocation1 [shape = 'u32[144,128]{1,0:T(1,128)}', space=vmem, size = 0x12000, scoped, tag = 'internal scratch']
  %s0 = inlined_call_operand.hbm [shape: f32[4,512], index: 0, kind: input, shape index: {}]
  %s1 = inlined_call_operand.hbm [shape: f32[4,512], index: 1, kind: output, shape index: {}]
  %s2 = sld [smem:[#allocation0]]
  $region18: #{tpu_custom_call.1} parent=0
    _
  %s4 = ssub.s32 1, %s2
  %s5 = scalar_select 0, %s4, %s2
  $region1: #{tpu_custom_call.1} parent=0
    #allocation2 [shape = 'u8[8192]{0}', space=vmem, size = 0x2000, scoped, tag = 'input window, operand 0, single buffered']
    #allocation3 [shape = 's32[1]{0}', space=sflag, size = 0x4, scoped, tag = 'scoped memory for tpu_custom_call.1']
    #allocation4 [shape = 's32[1]{0}', space=sflag, size = 0x4, scoped, tag = 'scoped memory for tpu_custom_call.1']
    #allocation5 [shape = 'u8[8192]{0}', space=vmem, size = 0x2000, scoped, tag = 'output window, operand 0, single buffered']
    %6 = vsyncpa [#allocation3], 0
    %7 = vsyncpa [#allocation4], 0
    // Predicated region
    $region2: #{tpu_custom_call.1} parent=1 // pred_check
      _
    $region3: #{tpu_custom_call.1} parent=1 // pred_check_branch
      %9 = sbr.rel (0) target = $region5
    $region4: #{tpu_custom_call.1} parent=1 // pred_region
      %s11 = ssub.s32 256, 256
      %12 = vsyncadd [#allocation3], %s11
      %s14 = sshll.u32 [#allocation2], 4
      %s15 = int_to_ptr.vmem [resolvable:$true] %s14
      %17 = dma.hbm_to_vmem [thread:$0]  %s0, 256, %s15, [#allocation3]
    $region5: #{tpu_custom_call.1} parent=1 // pred_fallthru
      _
    // Predicated region
    $region6: #{tpu_custom_call.1} parent=1 // pred_check
      _
    $region7: #{tpu_custom_call.1} parent=1 // pred_check_branch
      %19 = sbr.rel (0) target = $region9
    $region8: #{tpu_custom_call.1} parent=1 // pred_region
      %20 = dma.done [#allocation3], 256
    $region9: #{tpu_custom_call.1} parent=1 // pred_fallthru
      _
    %v21 = vld [vmem:[#allocation2] sm:$0xff]
    %v22 = vld [vmem:[#allocation2 + $0x8] sm:$0xff]
    %v23 = vadd.f32 %v21, 1.0
    %v24 = vadd.f32 %v22, 1.0
    %vm25 = vcmp.eq.f32.partialorder %v23, 1.0
    %vm26 = vcmp.eq.f32.partialorder %v24, 1.0
    %v27 = vlog2.pop %v23
    %v28 = vmul.f32 %v27, 0.6931472
    %v29 = vlog2.pop %v24
    %v30 = vmul.f32 %v29, 0.6931472
    %v31 = vsub.f32 %v23, 1.0
    %v32 = vsub.f32 %v24, 1.0
    %v33 = vrcp.pop %v31
    %v34 = vmul.f32 %v21, %v33
    %v35 = vrcp.pop %v32
    %v36 = vmul.f32 %v22, %v35
    %v37 = vmul.f32 %v28, %v34
    %v38 = vmul.f32 %v30, %v36
    %v39 = vsel %vm25, %v21, %v37
    %v40 = vsel %vm26, %v22, %v38
    %v41 = vsub.f32 0.0, %v21
    %v42 = vsub.f32 0.0, %v22
    %v43 = vadd.f32 %v41, 1.0
    %v44 = vadd.f32 %v42, 1.0
    %vm45 = vcmp.eq.f32.partialorder %v43, 1.0
    %vm46 = vcmp.eq.f32.partialorder %v44, 1.0
    %v47 = vlog2.pop %v43
    %v48 = vmul.f32 %v47, 0.6931472
    %v49 = vlog2.pop %v44
    %v50 = vmul.f32 %v49, 0.6931472
    %v51 = vsub.f32 %v43, 1.0
    %v52 = vsub.f32 %v44, 1.0
    %v53 = vrcp.pop %v51
    %v54 = vmul.f32 %v41, %v53
    %v55 = vrcp.pop %v52
    %v56 = vmul.f32 %v42, %v55
    %v57 = vmul.f32 %v48, %v54
    %v58 = vmul.f32 %v50, %v56
    %v59 = vsel %vm45, %v41, %v57
    %v60 = vsel %vm46, %v42, %v58
    %v61 = vsub.f32 %v39, %v59
    %v62 = vsub.f32 %v40, %v60
    %v63 = vmul.f32 %v61, 0.5
    %v64 = vmul.f32 %v62, 0.5
    %65 = vst [vmem:[#allocation5] sm:$0xff] %v63
    %66 = vst [vmem:[#allocation5 + $0x8] sm:$0xff] %v64
    // Predicated region
    $region10: #{tpu_custom_call.1} parent=1 // pred_check
      _
    $region11: #{tpu_custom_call.1} parent=1 // pred_check_branch
      %68 = sbr.rel (0) target = $region13
    $region12: #{tpu_custom_call.1} parent=1 // pred_region
      %s70 = ssub.s32 256, 256
      %71 = vsyncadd [#allocation4], %s70
      %s73 = sshll.u32 [#allocation5], 4
      %s74 = int_to_ptr.vmem [resolvable:$true] %s73
      %76 = dma.vmem_to_hbm [thread:$0]  %s74, 256, %s1, [#allocation4]
    $region13: #{tpu_custom_call.1} parent=1 // pred_fallthru
      _
    // Predicated region
    $region14: #{tpu_custom_call.1} parent=1 // pred_check
      _
    $region15: #{tpu_custom_call.1} parent=1 // pred_check_branch
      %78 = sbr.rel (0) target = $region17
    $region16: #{tpu_custom_call.1} parent=1 // pred_region
      %79 = dma.done [#allocation4], 256
    $region17: #{tpu_custom_call.1} parent=1 // pred_fallthru
      _
    %80 = vsyncpa [#allocation3], 1
    %81 = vsyncpa [#allocation4], 1

</llo_original>
